<compile_context>
chip_gen: v7x
topology: tpu7x:2x2x1
jax: 0.10.0
libtpu: 0.0.40
codegen_flags: <defaults>
</compile_context>

<pallas_src>
import functools

import jax
import jax.numpy as jnp
from jax.experimental import pallas as pl
from jax.experimental.pallas import tpu as pltpu

NEG_SLOPE = 0.01   # nn.LeakyReLU default negative_slope
DROP_P = 0.75      # nn.Dropout(p=0.75)
HIDDEN = 100
LANE = 128


def _round_up(n, m):
    return (n + m - 1) // m * m


def _leaky_relu(h):
    return jnp.where(h > 0, h, NEG_SLOPE * h)


def mlp_kernel(x_ref, *rest, training):
    if training:
        (m1_ref, m2_ref,
         w1_ref, b1_ref, w2_ref, b2_ref, w3_ref, b3_ref, o_ref) = rest
    else:
        (w1_ref, b1_ref, w2_ref, b2_ref, w3_ref, b3_ref, o_ref) = rest

    # Layer 1: Linear (bf16 MXU, f32 acc) -> Dropout -> LeakyReLU (f32 VPU)
    h = jnp.dot(x_ref[...], w1_ref[...],
                preferred_element_type=jnp.float32) + b1_ref[...]
    if training:
        h = h * m1_ref[...].astype(jnp.float32)
    h = _leaky_relu(h)

    # Layer 2: Linear -> Dropout -> LeakyReLU
    h = jnp.dot(h.astype(jnp.bfloat16), w2_ref[...],
                preferred_element_type=jnp.float32) + b2_ref[...]
    if training:
        h = h * m2_ref[...].astype(jnp.float32)
    h = _leaky_relu(h)

    # Layer 3: Linear (output head)
    out = jnp.dot(h.astype(jnp.bfloat16), w3_ref[...],
                  preferred_element_type=jnp.float32) + b3_ref[...]
    o_ref[...] = out.astype(o_ref.dtype)


def net_forward(params, x, *, key=None, training=True, block_batch=1024):
    """Forward pass of `net`. training=True reproduces train-mode dropout."""
    w1, b1, w2, b2, w3, b3 = params
    batch, size_in = x.shape
    hidden = w1.shape[1]
    size_out = w3.shape[1]

    hid_p = _round_up(hidden, LANE)       # 100 -> 128 (dense lanes)
    out_p = _round_up(size_out, LANE)     # lane-dense output store

    tb = min(block_batch, _round_up(batch, 8))
    batch_p = _round_up(batch, tb)
    grid = (batch_p // tb,)

    # --- pad + cast operands once, outside the kernel ------------------------
    xp = jnp.zeros((batch_p, size_in), jnp.bfloat16
                   ).at[:batch].set(x.astype(jnp.bfloat16))
    w1p = jnp.zeros((size_in, hid_p), jnp.bfloat16
                    ).at[:, :hidden].set(w1.astype(jnp.bfloat16))
    w2p = jnp.zeros((hid_p, hid_p), jnp.bfloat16
                    ).at[:hidden, :hidden].set(w2.astype(jnp.bfloat16))
    w3p = jnp.zeros((hid_p, out_p), jnp.bfloat16
                    ).at[:hidden, :size_out].set(w3.astype(jnp.bfloat16))
    b1p = jnp.zeros((1, hid_p), jnp.float32).at[:, :hidden].set(b1)
    b2p = jnp.zeros((1, hid_p), jnp.float32).at[:, :hidden].set(b2)
    b3p = jnp.zeros((1, out_p), jnp.float32).at[:, :size_out].set(b3)

    row_spec = lambda cols: pl.BlockSpec((tb, cols), lambda i: (i, 0))
    const_spec = lambda shape: pl.BlockSpec(shape, lambda i: (0, 0))

    weight_specs = [
        const_spec((size_in, hid_p)), const_spec((1, hid_p)),
        const_spec((hid_p, hid_p)),   const_spec((1, hid_p)),
        const_spec((hid_p, out_p)),   const_spec((1, out_p)),
    ]

    if training:
        if key is None:
            key = jax.random.PRNGKey(0)
        keep = 1.0 - DROP_P
        k1, k2 = jax.random.split(key)
        # Inverted dropout: mask in {0, 1/keep}; 1/0.25 = 4.0 is exact in bf16.
        m1 = (jax.random.bernoulli(k1, keep, (batch_p, hid_p))
              .astype(jnp.float32) * (1.0 / keep)).astype(jnp.bfloat16)
        m2 = (jax.random.bernoulli(k2, keep, (batch_p, hid_p))
              .astype(jnp.float32) * (1.0 / keep)).astype(jnp.bfloat16)
        inputs = (xp, m1, m2, w1p, b1p, w2p, b2p, w3p, b3p)
        in_specs = [row_spec(size_in), row_spec(hid_p), row_spec(hid_p)] \
            + weight_specs
    else:
        inputs = (xp, w1p, b1p, w2p, b2p, w3p, b3p)
        in_specs = [row_spec(size_in)] + weight_specs

    kernel = functools.partial(mlp_kernel, training=training)
    out = pl.pallas_call(
        kernel,
        out_shape=jax.ShapeDtypeStruct((batch_p, out_p), jnp.float32),
        grid=grid,
        in_specs=in_specs,
        out_specs=pl.BlockSpec((tb, out_p), lambda i: (i, 0)),
        compiler_params=pltpu.CompilerParams(
            dimension_semantics=("parallel",)),
    )(*inputs)
    return out[:batch, :size_out]


def init_params(key, size_in, size_out, hidden=HIDDEN):
    """Deterministic init mimicking PyTorch's U(-1/sqrt(fan_in), 1/sqrt(fan_in))."""
    def linear(k, fan_in, fan_out):
        kw, kb = jax.random.split(k)
        bound = 1.0 / (fan_in ** 0.5)
        w = jax.random.uniform(kw, (fan_in, fan_out), jnp.float32, -bound, bound)
        b = jax.random.uniform(kb, (1, fan_out), jnp.float32, -bound, bound)
        return w, b

    k1, k2, k3 = jax.random.split(key, 3)
    w1, b1 = linear(k1, size_in, hidden)
    w2, b2 = linear(k2, hidden, hidden)
    w3, b3 = linear(k3, hidden, size_out)
    return (w1, b1, w2, b2, w3, b3)


def _eval_reference(params, x):
    """Pure-JAX eval-mode reference (dropout = identity)."""
    w1, b1, w2, b2, w3, b3 = params
    h = _leaky_relu(x @ w1 + b1)
    h = _leaky_relu(h @ w2 + b2)
    return h @ w3 + b3


if __name__ == "__main__":
    size_in, size_out, batch = 32, 8, 8

    key = jax.random.PRNGKey(0)
    kx, kp, kd = jax.random.split(key, 3)
    x = jax.random.normal(kx, (batch, size_in), dtype=jnp.float32)
    params = init_params(kp, size_in, size_out)

    # Train-mode forward (dropout active, deterministic given `key`).
    out_train = net_forward(params, x, key=kd, training=True)
    # Eval-mode forward (dropout = identity).
    out_eval = net_forward(params, x, training=False)

    jax.block_until_ready(out_train)
    jax.block_until_ready(out_eval)

    assert out_train.shape == (batch, size_out)
    assert out_eval.shape == (batch, size_out)
    assert bool(jnp.all(jnp.isfinite(out_train)))
    assert bool(jnp.all(jnp.isfinite(out_eval)))

    # Eval-mode numerics vs pure-JAX reference (bf16 matmul / f32 acc tolerance).
    ref = _eval_reference(params, x)
    assert bool(jnp.allclose(out_eval, ref, rtol=5e-2, atol=5e-2))

    print("KERNEL_OK")
</pallas_src>

<mosaic_0001>
module attributes {stable_mosaic.version = 11 : i64} {
  func.func @mlp_kernel(%arg0: i32, %arg1: memref<8x32xbf16, #tpu.memory_space<vmem>>, %arg2: memref<8x128xbf16, #tpu.memory_space<vmem>>, %arg3: memref<8x128xbf16, #tpu.memory_space<vmem>>, %arg4: memref<32x128xbf16, #tpu.memory_space<vmem>>, %arg5: memref<1x128xf32, #tpu.memory_space<vmem>>, %arg6: memref<128x128xbf16, #tpu.memory_space<vmem>>, %arg7: memref<1x128xf32, #tpu.memory_space<vmem>>, %arg8: memref<128x128xbf16, #tpu.memory_space<vmem>>, %arg9: memref<1x128xf32, #tpu.memory_space<vmem>>, %arg10: memref<8x128xf32, #tpu.memory_space<vmem>>) attributes {dimension_semantics = [#tpu.dimension_semantics<parallel>], iteration_bounds = array<i64: 1>, scalar_prefetch = 0 : i64, scratch_operands = 0 : i64, tpu.core_type = #tpu.core_type<tc>, window_params = [{transform_indices = @transform_0, window_bounds = array<i64: 8, 32>}, {transform_indices = @transform_1, window_bounds = array<i64: 8, 128>}, {transform_indices = @transform_2, window_bounds = array<i64: 8, 128>}, {pipeline_mode = #tpu.pipeline_mode<synchronous>, transform_indices = @transform_3, window_bounds = array<i64: 32, 128>}, {pipeline_mode = #tpu.pipeline_mode<synchronous>, transform_indices = @transform_4, window_bounds = array<i64: 1, 128>}, {pipeline_mode = #tpu.pipeline_mode<synchronous>, transform_indices = @transform_5, window_bounds = array<i64: 128, 128>}, {pipeline_mode = #tpu.pipeline_mode<synchronous>, transform_indices = @transform_6, window_bounds = array<i64: 1, 128>}, {pipeline_mode = #tpu.pipeline_mode<synchronous>, transform_indices = @transform_7, window_bounds = array<i64: 128, 128>}, {pipeline_mode = #tpu.pipeline_mode<synchronous>, transform_indices = @transform_8, window_bounds = array<i64: 1, 128>}, {transform_indices = @transform_9, window_bounds = array<i64: 8, 128>}]} {
    %c0 = arith.constant 0 : index
    %c0_0 = arith.constant 0 : index
    %0 = vector.load %arg1[%c0, %c0_0] : memref<8x32xbf16, #tpu.memory_space<vmem>>, vector<8x32xbf16>
    %c0_1 = arith.constant 0 : index
    %c0_2 = arith.constant 0 : index
    %1 = vector.load %arg4[%c0_1, %c0_2] : memref<32x128xbf16, #tpu.memory_space<vmem>>, vector<32x128xbf16>
    %cst = arith.constant dense<0.000000e+00> : vector<8x128xf32>
    %2 = tpu.matmul %0, %1, %cst {dimension_numbers = #tpu.dot_dimension_numbers<[1], [0], [0], [1], [0, 0, 1, 1], [], []>} : vector<8x32xbf16>, vector<32x128xbf16>, vector<8x128xf32> -> vector<8x128xf32>
    %c0_3 = arith.constant 0 : index
    %c0_4 = arith.constant 0 : index
    %3 = vector.load %arg5[%c0_3, %c0_4] : memref<1x128xf32, #tpu.memory_space<vmem>>, vector<1x128xf32>
    %4 = vector.broadcast %3 : vector<1x128xf32> to vector<8x128xf32>
    %5 = arith.addf %2, %4 : vector<8x128xf32>
    %c0_5 = arith.constant 0 : index
    %c0_6 = arith.constant 0 : index
    %6 = vector.load %arg2[%c0_5, %c0_6] : memref<8x128xbf16, #tpu.memory_space<vmem>>, vector<8x128xbf16>
    %7 = arith.extf %6 : vector<8x128xbf16> to vector<8x128xf32>
    %8 = arith.mulf %5, %7 : vector<8x128xf32>
    %cst_7 = arith.constant 0.000000e+00 : f32
    %9 = vector.broadcast %cst_7 : f32 to vector<8x128xf32>
    %10 = arith.cmpf ogt, %8, %9 : vector<8x128xf32>
    %cst_8 = arith.constant 0.00999999977 : f32
    %11 = vector.broadcast %cst_8 : f32 to vector<8x128xf32>
    %12 = arith.mulf %11, %8 : vector<8x128xf32>
    %13 = arith.select %10, %8, %12 : vector<8x128xi1>, vector<8x128xf32>
    %14 = arith.truncf %13 : vector<8x128xf32> to vector<8x128xbf16>
    %c0_9 = arith.constant 0 : index
    %c0_10 = arith.constant 0 : index
    %15 = vector.load %arg6[%c0_9, %c0_10] : memref<128x128xbf16, #tpu.memory_space<vmem>>, vector<128x128xbf16>
    %cst_11 = arith.constant dense<0.000000e+00> : vector<8x128xf32>
    %16 = tpu.matmul %14, %15, %cst_11 {dimension_numbers = #tpu.dot_dimension_numbers<[1], [0], [0], [1], [0, 0, 1, 1], [], []>} : vector<8x128xbf16>, vector<128x128xbf16>, vector<8x128xf32> -> vector<8x128xf32>
    %c0_12 = arith.constant 0 : index
    %c0_13 = arith.constant 0 : index
    %17 = vector.load %arg7[%c0_12, %c0_13] : memref<1x128xf32, #tpu.memory_space<vmem>>, vector<1x128xf32>
    %18 = vector.broadcast %17 : vector<1x128xf32> to vector<8x128xf32>
    %19 = arith.addf %16, %18 : vector<8x128xf32>
    %c0_14 = arith.constant 0 : index
    %c0_15 = arith.constant 0 : index
    %20 = vector.load %arg3[%c0_14, %c0_15] : memref<8x128xbf16, #tpu.memory_space<vmem>>, vector<8x128xbf16>
    %21 = arith.extf %20 : vector<8x128xbf16> to vector<8x128xf32>
    %22 = arith.mulf %19, %21 : vector<8x128xf32>
    %cst_16 = arith.constant 0.000000e+00 : f32
    %23 = vector.broadcast %cst_16 : f32 to vector<8x128xf32>
    %24 = arith.cmpf ogt, %22, %23 : vector<8x128xf32>
    %cst_17 = arith.constant 0.00999999977 : f32
    %25 = vector.broadcast %cst_17 : f32 to vector<8x128xf32>
    %26 = arith.mulf %25, %22 : vector<8x128xf32>
    %27 = arith.select %24, %22, %26 : vector<8x128xi1>, vector<8x128xf32>
    %28 = arith.truncf %27 : vector<8x128xf32> to vector<8x128xbf16>
    %c0_18 = arith.constant 0 : index
    %c0_19 = arith.constant 0 : index
    %29 = vector.load %arg8[%c0_18, %c0_19] : memref<128x128xbf16, #tpu.memory_space<vmem>>, vector<128x128xbf16>
    %cst_20 = arith.constant dense<0.000000e+00> : vector<8x128xf32>
    %30 = tpu.matmul %28, %29, %cst_20 {dimension_numbers = #tpu.dot_dimension_numbers<[1], [0], [0], [1], [0, 0, 1, 1], [], []>} : vector<8x128xbf16>, vector<128x128xbf16>, vector<8x128xf32> -> vector<8x128xf32>
    %c0_21 = arith.constant 0 : index
    %c0_22 = arith.constant 0 : index
    %31 = vector.load %arg9[%c0_21, %c0_22] : memref<1x128xf32, #tpu.memory_space<vmem>>, vector<1x128xf32>
    %32 = vector.broadcast %31 : vector<1x128xf32> to vector<8x128xf32>
    %33 = arith.addf %30, %32 : vector<8x128xf32>
    %c0_23 = arith.constant 0 : index
    %c0_24 = arith.constant 0 : index
    %34 = vector.load %arg10[%c0_23, %c0_24] : memref<8x128xf32, #tpu.memory_space<vmem>>, vector<8x128xf32>
    tpu.vector_store %arg10[%c0_23, %c0_24], %33 {strides = array<i32>} : memref<8x128xf32, #tpu.memory_space<vmem>>, vector<8x128xf32>,
    return
  }
  func.func @transform_0(%arg0: i32) -> (i32, i32) {
    %c0_i32 = arith.constant 0 : i32
    %c0_i32_0 = arith.constant 0 : i32
    return %arg0, %c0_i32 : i32, i32
  }
  func.func @transform_1(%arg0: i32) -> (i32, i32) {
    %c0_i32 = arith.constant 0 : i32
    %c0_i32_0 = arith.constant 0 : i32
    return %arg0, %c0_i32 : i32, i32
  }
  func.func @transform_2(%arg0: i32) -> (i32, i32) {
    %c0_i32 = arith.constant 0 : i32
    %c0_i32_0 = arith.constant 0 : i32
    return %arg0, %c0_i32 : i32, i32
  }
  func.func @transform_3(%arg0: i32) -> (i32, i32) {
    %c0_i32 = arith.constant 0 : i32
    %c0_i32_0 = arith.constant 0 : i32
    %c0_i32_1 = arith.constant 0 : i32
    return %c0_i32, %c0_i32_0 : i32, i32
  }
  func.func @transform_4(%arg0: i32) -> (i32, i32) {
    %c0_i32 = arith.constant 0 : i32
    %c0_i32_0 = arith.constant 0 : i32
    %c0_i32_1 = arith.constant 0 : i32
    return %c0_i32, %c0_i32_0 : i32, i32
  }
  func.func @transform_5(%arg0: i32) -> (i32, i32) {
    %c0_i32 = arith.constant 0 : i32
    %c0_i32_0 = arith.constant 0 : i32
    %c0_i32_1 = arith.constant 0 : i32
    return %c0_i32, %c0_i32_0 : i32, i32
  }
  func.func @transform_6(%arg0: i32) -> (i32, i32) {
    %c0_i32 = arith.constant 0 : i32
    %c0_i32_0 = arith.constant 0 : i32
    %c0_i32_1 = arith.constant 0 : i32
    return %c0_i32, %c0_i32_0 : i32, i32
  }
  func.func @transform_7(%arg0: i32) -> (i32, i32) {
    %c0_i32 = arith.constant 0 : i32
    %c0_i32_0 = arith.constant 0 : i32
    %c0_i32_1 = arith.constant 0 : i32
    return %c0_i32, %c0_i32_0 : i32, i32
  }
  func.func @transform_8(%arg0: i32) -> (i32, i32) {
    %c0_i32 = arith.constant 0 : i32
    %c0_i32_0 = arith.constant 0 : i32
    %c0_i32_1 = arith.constant 0 : i32
    return %c0_i32, %c0_i32_0 : i32, i32
  }
  func.func @transform_9(%arg0: i32) -> (i32, i32) {
    %c0_i32 = arith.constant 0 : i32
    %c0_i32_0 = arith.constant 0 : i32
    return %arg0, %c0_i32 : i32, i32
  }
}

</mosaic_0001>

<llo_original>
// kernel: tpu_custom_call.1
$region0: #{tpu_custom_call.1}
  #allocation0 [shape = 'u32[]', space=smem, size = 0x4, offset = 0x4, fixed_abs, tag = 'smem constant byte address 0x4 - core index']
  #allocation1 [shape = 'u32[144,128]{1,0:T(1,128)}', space=vmem, size = 0x12000, scoped, tag = 'internal scratch']
  %s0 = inlined_call_operand.hbm [shape: bf16[8,32], index: 0, kind: input, shape index: {}]
  %s1 = inlined_call_operand.hbm [shape: bf16[8,128], index: 1, kind: input, shape index: {}]
  %s2 = inlined_call_operand.vmem [shape: bf16[8,128], index: 2, kind: input, shape index: {}]
  %s3 = inlined_call_operand.hbm [shape: bf16[32,128], index: 3, kind: input, shape index: {}]
  %s4 = inlined_call_operand.vmem [shape: f32[1,128], index: 4, kind: input, shape index: {}]
  %s5 = inlined_call_operand.hbm [shape: bf16[128,128], index: 5, kind: input, shape index: {}]
  %s6 = inlined_call_operand.vmem [shape: f32[1,128], index: 6, kind: input, shape index: {}]
  %s7 = inlined_call_operand.hbm [shape: bf16[128,128], index: 7, kind: input, shape index: {}]
  %s8 = inlined_call_operand.vmem [shape: f32[1,128], index: 8, kind: input, shape index: {}]
  %s9 = inlined_call_operand.hbm [shape: f32[8,128], index: 9, kind: output, shape index: {}]
  %s10 = sld [smem:[#allocation0]]
  $region66: #{tpu_custom_call.1} parent=0
    _
  %s12 = ssub.s32 1, %s10
  %s13 = scalar_select 0, %s12, %s10
  $region1: #{tpu_custom_call.1} parent=0
    #allocation2 [shape = 'u8[2048]{0}', space=vmem, size = 0x800, scoped, tag = 'input window, operand 0, single buffered']
    #allocation3 [shape = 's32[1]{0}', space=sflag, size = 0x4, scoped, tag = 'scoped memory for tpu_custom_call.1']
    #allocation4 [shape = 's32[1]{0}', space=sflag, size = 0x4, scoped, tag = 'scoped memory for tpu_custom_call.1']
    #allocation5 [shape = 'u8[2048]{0}', space=vmem, size = 0x800, scoped, tag = 'input window, operand 1, single buffered']
    #allocation6 [shape = 's32[1]{0}', space=sflag, size = 0x4, scoped, tag = 'scoped memory for tpu_custom_call.1']
    #allocation7 [shape = 'u8[8192]{0}', space=vmem, size = 0x2000, scoped, tag = 'input window, operand 3, single buffered']
    #allocation8 [shape = 'u8[32768]{0}', space=vmem, size = 0x8000, scoped, tag = 'input window, operand 5, single buffered']
    #allocation9 [shape = 's32[1]{0}', space=sflag, size = 0x4, scoped, tag = 'scoped memory for tpu_custom_call.1']
    #allocation10 [shape = 'u8[32768]{0}', space=vmem, size = 0x8000, scoped, tag = 'input window, operand 7, single buffered']
    #allocation11 [shape = 'u8[4096]{0}', space=vmem, size = 0x1000, scoped, tag = 'output window, operand 0, single buffered']
    %14 = vsyncpa [#allocation3], 0
    %15 = vsyncpa [#allocation6], 0
    %16 = vsyncpa [#allocation9], 0
    %17 = vsyncpa [#allocation4], 0
    // Predicated region
    $region2: #{tpu_custom_call.1} parent=1 // pred_check
      _
    $region3: #{tpu_custom_call.1} parent=1 // pred_check_branch
      %19 = sbr.rel (0) target = $region5
    $region4: #{tpu_custom_call.1} parent=1 // pred_region
      %s21 = ssub.s32 64, 64
      %22 = vsyncadd [#allocation3], %s21
      %s24 = sshll.u32 [#allocation2], 4
      %s25 = int_to_ptr.vmem [resolvable:$true] %s24
      %27 = dma.hbm_to_vmem [thread:$0]  %s0, 64, %s25, [#allocation3]
    $region5: #{tpu_custom_call.1} parent=1 // pred_fallthru
      _
    // Predicated region
    $region6: #{tpu_custom_call.1} parent=1 // pred_check
      _
    $region7: #{tpu_custom_call.1} parent=1 // pred_check_branch
      %29 = sbr.rel (0) target = $region9
    $region8: #{tpu_custom_call.1} parent=1 // pred_region
      %s31 = ssub.s32 64, 64
      %32 = vsyncadd [#allocation6], %s31
      %s34 = sshll.u32 [#allocation5], 4
      %s35 = int_to_ptr.vmem [resolvable:$true] %s34
      %37 = dma.hbm_to_vmem [thread:$0]  %s1, 64, %s35, [#allocation6]
    $region9: #{tpu_custom_call.1} parent=1 // pred_fallthru
      _
    // Predicated region
    $region10: #{tpu_custom_call.1} parent=1 // pred_check
      _
    $region11: #{tpu_custom_call.1} parent=1 // pred_check_branch
      %39 = sbr.rel (0) target = $region13
    $region12: #{tpu_custom_call.1} parent=1 // pred_region
      _
    $region13: #{tpu_custom_call.1} parent=1 // pred_fallthru
      _
    // Predicated region
    $region14: #{tpu_custom_call.1} parent=1 // pred_check
      _
    $region15: #{tpu_custom_call.1} parent=1 // pred_check_branch
      %41 = sbr.rel (0) target = $region17
    $region16: #{tpu_custom_call.1} parent=1 // pred_region
      %s43 = ssub.s32 256, 256
      %44 = vsyncadd [#allocation6], %s43
      %s45 = sshll.u32 [#allocation7], 4
      %s46 = int_to_ptr.vmem [resolvable:$true] %s45
      %51 = dma.hbm_to_vmem [thread:$0]  %s3, 256, %s46, [#allocation6], 64, 64, 4
    $region17: #{tpu_custom_call.1} parent=1 // pred_fallthru
      _
    // Predicated region
    $region18: #{tpu_custom_call.1} parent=1 // pred_check
      _
    $region19: #{tpu_custom_call.1} parent=1 // pred_check_branch
      %53 = sbr.rel (0) target = $region21
    $region20: #{tpu_custom_call.1} parent=1 // pred_region
      _
    $region21: #{tpu_custom_call.1} parent=1 // pred_fallthru
      _
    // Predicated region
    $region22: #{tpu_custom_call.1} parent=1 // pred_check
      _
    $region23: #{tpu_custom_call.1} parent=1 // pred_check_branch
      %55 = sbr.rel (0) target = $region25
    $region24: #{tpu_custom_call.1} parent=1 // pred_region
      %s57 = ssub.s32 1024, 1024
      %58 = vsyncadd [#allocation9], %s57
      %s59 = sshll.u32 [#allocation8], 4
      %s60 = int_to_ptr.vmem [resolvable:$true] %s59
      %65 = dma.hbm_to_vmem [thread:$0]  %s5, 1024, %s60, [#allocation9], 64, 64, 4
    $region25: #{tpu_custom_call.1} parent=1 // pred_fallthru
      _
    // Predicated region
    $region26: #{tpu_custom_call.1} parent=1 // pred_check
      _
    $region27: #{tpu_custom_call.1} parent=1 // pred_check_branch
      %67 = sbr.rel (0) target = $region29
    $region28: #{tpu_custom_call.1} parent=1 // pred_region
      _
    $region29: #{tpu_custom_call.1} parent=1 // pred_fallthru
      _
    // Predicated region
    $region30: #{tpu_custom_call.1} parent=1 // pred_check
      _
    $region31: #{tpu_custom_call.1} parent=1 // pred_check_branch
      %69 = sbr.rel (0) target = $region33
    $region32: #{tpu_custom_call.1} parent=1 // pred_region
      %s71 = ssub.s32 1024, 1024
      %72 = vsyncadd [#allocation9], %s71
      %s73 = sshll.u32 [#allocation10], 4
      %s74 = int_to_ptr.vmem [resolvable:$true] %s73
      %79 = dma.hbm_to_vmem [thread:$0]  %s7, 1024, %s74, [#allocation9], 64, 64, 4
    $region33: #{tpu_custom_call.1} parent=1 // pred_fallthru
      _
    // Predicated region
    $region34: #{tpu_custom_call.1} parent=1 // pred_check
      _
    $region35: #{tpu_custom_call.1} parent=1 // pred_check_branch
      %81 = sbr.rel (0) target = $region37
    $region36: #{tpu_custom_call.1} parent=1 // pred_region
      _
    $region37: #{tpu_custom_call.1} parent=1 // pred_fallthru
      _
    // Predicated region
    $region38: #{tpu_custom_call.1} parent=1 // pred_check
      _
    $region39: #{tpu_custom_call.1} parent=1 // pred_check_branch
      %83 = sbr.rel (0) target = $region41
    $region40: #{tpu_custom_call.1} parent=1 // pred_region
      %84 = dma.done [#allocation3], 64
    $region41: #{tpu_custom_call.1} parent=1 // pred_fallthru
      _
    // Predicated region
    $region42: #{tpu_custom_call.1} parent=1 // pred_check
      _
    $region43: #{tpu_custom_call.1} parent=1 // pred_check_branch
      %86 = sbr.rel (0) target = $region45
    $region44: #{tpu_custom_call.1} parent=1 // pred_region
      %87 = dma.done [#allocation6], 64
    $region45: #{tpu_custom_call.1} parent=1 // pred_fallthru
      _
    // Predicated region
    $region46: #{tpu_custom_call.1} parent=1 // pred_check
      _
    $region47: #{tpu_custom_call.1} parent=1 // pred_check_branch
      %89 = sbr.rel (0) target = $region49
    $region48: #{tpu_custom_call.1} parent=1 // pred_region
      %90 = dma.done [#allocation6], 256
    $region49: #{tpu_custom_call.1} parent=1 // pred_fallthru
      _
    // Predicated region
    $region50: #{tpu_custom_call.1} parent=1 // pred_check
      _
    $region51: #{tpu_custom_call.1} parent=1 // pred_check_branch
      %92 = sbr.rel (0) target = $region53
    $region52: #{tpu_custom_call.1} parent=1 // pred_region
      %93 = dma.done [#allocation9], 1024
    $region53: #{tpu_custom_call.1} parent=1 // pred_fallthru
      _
    // Predicated region
    $region54: #{tpu_custom_call.1} parent=1 // pred_check
      _
    $region55: #{tpu_custom_call.1} parent=1 // pred_check_branch
      %95 = sbr.rel (0) target = $region57
    $region56: #{tpu_custom_call.1} parent=1 // pred_region
      %96 = dma.done [#allocation9], 1024
    $region57: #{tpu_custom_call.1} parent=1 // pred_fallthru
      _
    %v98 = vld [vmem:[#allocation2] sm:$0xf]
    %v99 = vld [vmem:[#allocation7] sm:$0xf]
    %v100 = vld [vmem:[#allocation7 + $0x4] sm:$0xf]
    %v101 = vld [vmem:[#allocation7 + $0x8] sm:$0xf]
    %v102 = vld [vmem:[#allocation7 + $0xc] sm:$0xf]
    %v103 = vld [vmem:[%s4] sm:$0x1]
    %v105 = vlaneseq
    %v106 = vshrl.u32 %v105, 7
    %v107 = vsub.s32 0, %v106
    %v108 = vrot.slane %v103, %v107
    %v114 = vunpack.c.l.b16 %v99
    %v115 = vunpack.c.l.b16 %v100
    %v116 = vunpack.c.l.b16 %v101
    %v117 = vunpack.c.l.b16 %v102
    %v118 = vpack.c.b16 %v115, %v114
    %v119 = vpack.c.b16 %v117, %v116
    %vm122 = vcmask 261120
    %v124 = vsel %vm122, %v98, 0
    %126 = vmatprep.subr.bf16.mxu0 0
    %127 = vmatpush1.bf16.msra.mxu0 %v118
    %128 = vmatprep.subr.bf16.mxu0 0
    %129 = vmatpush1.bf16.msra.mxu0 %v119
    %130 = vmatprep.subr.bf16.mxu0 0
    %131 = vmatpush1.bf16.msra.mxu0 0
    %132 = vmatprep.subr.bf16.mxu0 0
    %133 = vmatpush1.bf16.msra.mxu0 0
    %134 = vmatprep.subr.bf16.mxu0 0
    %135 = vmatpush1.bf16.msra.mxu0 0
    %136 = vmatprep.subr.bf16.mxu0 0
    %137 = vmatpush1.bf16.msra.mxu0 0
    %138 = vmatprep.subr.bf16.mxu0 0
    %139 = vmatpush1.bf16.msra.mxu0 0
    %140 = vmatprep.subr.bf16.mxu0 0
    %141 = vmatpush1.bf16.msra.mxu0 0
    %142 = vmatprep.subr.bf16.mxu0 0
    %143 = vmatpush1.bf16.msra.mxu0 0
    %144 = vmatprep.subr.bf16.mxu0 0
    %145 = vmatpush1.bf16.msra.mxu0 0
    %146 = vmatprep.subr.bf16.mxu0 0
    %147 = vmatpush1.bf16.msra.mxu0 0
    %148 = vmatprep.subr.bf16.mxu0 0
    %149 = vmatpush1.bf16.msra.mxu0 0
    %150 = vmatprep.subr.bf16.mxu0 0
    %151 = vmatpush1.bf16.msra.mxu0 0
    %152 = vmatprep.subr.bf16.mxu0 0
    %153 = vmatpush1.bf16.msra.mxu0 0
    %154 = vmatprep.subr.bf16.mxu0 0
    %155 = vmatpush1.bf16.msra.mxu0 0
    %156 = vmatprep.subr.bf16.mxu0 0
    %157 = vmatpush1.bf16.msra.mxu0 0
    %158 = vmatprep.mubr.bf16.mxu0 0
    %159 = vmatmul.mubr.bf16.gmra.mrb[0].mxu0 %v124
    %v160 = vpop.f32.mrb[0].mxu0
    %v161 = vadd.f32 %v108, %v160
    %v162 = vpop.f32.mrb[0].mxu0
    %v163 = vpop.f32.mrb[0].mxu0
    %v164 = vpop.f32.mrb[0].mxu0
    %165 = vdwg.mxu0
    %v166 = vld [vmem:[#allocation5] sm:$0xf]
    %v167 = vunpack.c.l.bf16 %v166
    %v168 = vmul.f32 %v161, %v167
    %vm169 = vcmp.gt.f32.partialorder %v168, 0.0
    %v170 = vmul.f32 %v168, 0.01
    %v171 = vsel %vm169, %v168, %v170
    %v172 = vpack.c.bf16 %v171, %v171
    %v173 = vld [vmem:[#allocation8] sm:$0xf]
    %v174 = vld [vmem:[#allocation8 + $0x4] sm:$0xf]
    %v175 = vld [vmem:[#allocation8 + $0x8] sm:$0xf]
    %v176 = vld [vmem:[#allocation8 + $0xc] sm:$0xf]
    %v177 = vld [vmem:[#allocation8 + $0x10] sm:$0xf]
    %v178 = vld [vmem:[#allocation8 + $0x14] sm:$0xf]
    %v179 = vld [vmem:[#allocation8 + $0x18] sm:$0xf]
    %v180 = vld [vmem:[#allocation8 + $0x1c] sm:$0xf]
    %v181 = vld [vmem:[#allocation8 + $0x20] sm:$0xf]
    %v182 = vld [vmem:[#allocation8 + $0x24] sm:$0xf]
    %v183 = vld [vmem:[#allocation8 + $0x28] sm:$0xf]
    %v184 = vld [vmem:[#allocation8 + $0x2c] sm:$0xf]
    %v185 = vld [vmem:[#allocation8 + $0x30] sm:$0xf]
    %v186 = vld [vmem:[#allocation8 + $0x34] sm:$0xf]
    %v187 = vld [vmem:[#allocation8 + $0x38] sm:$0xf]
    %v188 = vld [vmem:[#allocation8 + $0x3c] sm:$0xf]
    %v189 = vld [vmem:[%s6] sm:$0x1]
    %v191 = vlaneseq
    %v192 = vshrl.u32 %v191, 7
    %v193 = vsub.s32 0, %v192
    %v194 = vrot.slane %v189, %v193
    %v212 = vunpack.c.l.b16 %v173
    %v213 = vunpack.c.l.b16 %v174
    %v214 = vunpack.c.l.b16 %v175
    %v215 = vunpack.c.l.b16 %v176
    %v216 = vunpack.c.l.b16 %v177
    %v217 = vunpack.c.l.b16 %v178
    %v218 = vunpack.c.l.b16 %v179
    %v219 = vunpack.c.l.b16 %v180
    %v220 = vunpack.c.l.b16 %v181
    %v221 = vunpack.c.l.b16 %v182
    %v222 = vunpack.c.l.b16 %v183
    %v223 = vunpack.c.l.b16 %v184
    %v224 = vunpack.c.l.b16 %v185
    %v225 = vunpack.c.l.b16 %v186
    %v226 = vunpack.c.l.b16 %v187
    %v227 = vunpack.c.l.b16 %v188
    %v228 = vpack.c.b16 %v213, %v212
    %v229 = vpack.c.b16 %v215, %v214
    %v230 = vpack.c.b16 %v217, %v216
    %v231 = vpack.c.b16 %v219, %v218
    %v232 = vpack.c.b16 %v221, %v220
    %v233 = vpack.c.b16 %v223, %v222
    %v234 = vpack.c.b16 %v225, %v224
    %v235 = vpack.c.b16 %v227, %v226
    %244 = vmatprep.subr.bf16.mxu0 0
    %245 = vmatpush1.bf16.msra.mxu0 %v228
    %246 = vmatprep.subr.bf16.mxu0 0
    %247 = vmatpush1.bf16.msra.mxu0 %v229
    %248 = vmatprep.subr.bf16.mxu0 0
    %249 = vmatpush1.bf16.msra.mxu0 %v230
    %250 = vmatprep.subr.bf16.mxu0 0
    %251 = vmatpush1.bf16.msra.mxu0 %v231
    %252 = vmatprep.subr.bf16.mxu0 0
    %253 = vmatpush1.bf16.msra.mxu0 %v232
    %254 = vmatprep.subr.bf16.mxu0 0
    %255 = vmatpush1.bf16.msra.mxu0 %v233
    %256 = vmatprep.subr.bf16.mxu0 0
    %257 = vmatpush1.bf16.msra.mxu0 %v234
    %258 = vmatprep.subr.bf16.mxu0 0
    %259 = vmatpush1.bf16.msra.mxu0 %v235
    %260 = vmatprep.subr.bf16.mxu0 0
    %261 = vmatpush1.bf16.msra.mxu0 0
    %262 = vmatprep.subr.bf16.mxu0 0
    %263 = vmatpush1.bf16.msra.mxu0 0
    %264 = vmatprep.subr.bf16.mxu0 0
    %265 = vmatpush1.bf16.msra.mxu0 0
    %266 = vmatprep.subr.bf16.mxu0 0
    %267 = vmatpush1.bf16.msra.mxu0 0
    %268 = vmatprep.subr.bf16.mxu0 0
    %269 = vmatpush1.bf16.msra.mxu0 0
    %270 = vmatprep.subr.bf16.mxu0 0
    %271 = vmatpush1.bf16.msra.mxu0 0
    %272 = vmatprep.subr.bf16.mxu0 0
    %273 = vmatpush1.bf16.msra.mxu0 0
    %274 = vmatprep.subr.bf16.mxu0 0
    %275 = vmatpush1.bf16.msra.mxu0 0
    %276 = vmatprep.mubr.bf16.mxu0 0
    %277 = vmatmul.mubr.bf16.gmra.mrb[0].mxu0 %v172
    %v278 = vpop.f32.mrb[0].mxu0
    %v279 = vadd.f32 %v194, %v278
    %v280 = vpop.f32.mrb[0].mxu0
    %v281 = vpop.f32.mrb[0].mxu0
    %v282 = vpop.f32.mrb[0].mxu0
    %283 = vdwg.mxu0
    %v284 = vld [vmem:[%s2] sm:$0xf]
    %v285 = vunpack.c.l.bf16 %v284
    %v286 = vmul.f32 %v279, %v285
    %vm287 = vcmp.gt.f32.partialorder %v286, 0.0
    %v288 = vmul.f32 %v286, 0.01
    %v289 = vsel %vm287, %v286, %v288
    %v290 = vpack.c.bf16 %v289, %v289
    %v291 = vld [vmem:[#allocation10] sm:$0xf]
    %v292 = vld [vmem:[#allocation10 + $0x4] sm:$0xf]
    %v293 = vld [vmem:[#allocation10 + $0x8] sm:$0xf]
    %v294 = vld [vmem:[#allocation10 + $0xc] sm:$0xf]
    %v295 = vld [vmem:[#allocation10 + $0x10] sm:$0xf]
    %v296 = vld [vmem:[#allocation10 + $0x14] sm:$0xf]
    %v297 = vld [vmem:[#allocation10 + $0x18] sm:$0xf]
    %v298 = vld [vmem:[#allocation10 + $0x1c] sm:$0xf]
    %v299 = vld [vmem:[#allocation10 + $0x20] sm:$0xf]
    %v300 = vld [vmem:[#allocation10 + $0x24] sm:$0xf]
    %v301 = vld [vmem:[#allocation10 + $0x28] sm:$0xf]
    %v302 = vld [vmem:[#allocation10 + $0x2c] sm:$0xf]
    %v303 = vld [vmem:[#allocation10 + $0x30] sm:$0xf]
    %v304 = vld [vmem:[#allocation10 + $0x34] sm:$0xf]
    %v305 = vld [vmem:[#allocation10 + $0x38] sm:$0xf]
    %v306 = vld [vmem:[#allocation10 + $0x3c] sm:$0xf]
    %v307 = vld [vmem:[%s8] sm:$0x1]
    %v309 = vlaneseq
    %v310 = vshrl.u32 %v309, 7
    %v311 = vsub.s32 0, %v310
    %v312 = vrot.slane %v307, %v311
    %v330 = vunpack.c.l.b16 %v291
    %v331 = vunpack.c.l.b16 %v292
    %v332 = vunpack.c.l.b16 %v293
    %v333 = vunpack.c.l.b16 %v294
    %v334 = vunpack.c.l.b16 %v295
    %v335 = vunpack.c.l.b16 %v296
    %v336 = vunpack.c.l.b16 %v297
    %v337 = vunpack.c.l.b16 %v298
    %v338 = vunpack.c.l.b16 %v299
    %v339 = vunpack.c.l.b16 %v300
    %v340 = vunpack.c.l.b16 %v301
    %v341 = vunpack.c.l.b16 %v302
    %v342 = vunpack.c.l.b16 %v303
    %v343 = vunpack.c.l.b16 %v304
    %v344 = vunpack.c.l.b16 %v305
    %v345 = vunpack.c.l.b16 %v306
    %v346 = vpack.c.b16 %v331, %v330
    %v347 = vpack.c.b16 %v333, %v332
    %v348 = vpack.c.b16 %v335, %v334
    %v349 = vpack.c.b16 %v337, %v336
    %v350 = vpack.c.b16 %v339, %v338
    %v351 = vpack.c.b16 %v341, %v340
    %v352 = vpack.c.b16 %v343, %v342
    %v353 = vpack.c.b16 %v345, %v344
    %362 = vmatprep.subr.bf16.mxu0 0
    %363 = vmatpush1.bf16.msra.mxu0 %v346
    %364 = vmatprep.subr.bf16.mxu0 0
    %365 = vmatpush1.bf16.msra.mxu0 %v347
    %366 = vmatprep.subr.bf16.mxu0 0
    %367 = vmatpush1.bf16.msra.mxu0 %v348
    %368 = vmatprep.subr.bf16.mxu0 0
    %369 = vmatpush1.bf16.msra.mxu0 %v349
    %370 = vmatprep.subr.bf16.mxu0 0
    %371 = vmatpush1.bf16.msra.mxu0 %v350
    %372 = vmatprep.subr.bf16.mxu0 0
    %373 = vmatpush1.bf16.msra.mxu0 %v351
    %374 = vmatprep.subr.bf16.mxu0 0
    %375 = vmatpush1.bf16.msra.mxu0 %v352
    %376 = vmatprep.subr.bf16.mxu0 0
    %377 = vmatpush1.bf16.msra.mxu0 %v353
    %378 = vmatprep.subr.bf16.mxu0 0
    %379 = vmatpush1.bf16.msra.mxu0 0
    %380 = vmatprep.subr.bf16.mxu0 0
    %381 = vmatpush1.bf16.msra.mxu0 0
    %382 = vmatprep.subr.bf16.mxu0 0
    %383 = vmatpush1.bf16.msra.mxu0 0
    %384 = vmatprep.subr.bf16.mxu0 0
    %385 = vmatpush1.bf16.msra.mxu0 0
    %386 = vmatprep.subr.bf16.mxu0 0
    %387 = vmatpush1.bf16.msra.mxu0 0
    %388 = vmatprep.subr.bf16.mxu0 0
    %389 = vmatpush1.bf16.msra.mxu0 0
    %390 = vmatprep.subr.bf16.mxu0 0
    %391 = vmatpush1.bf16.msra.mxu0 0
    %392 = vmatprep.subr.bf16.mxu0 0
    %393 = vmatpush1.bf16.msra.mxu0 0
    %394 = vmatprep.mubr.bf16.mxu0 0
    %395 = vmatmul.mubr.bf16.gmra.mrb[0].mxu0 %v290
    %v396 = vpop.f32.mrb[0].mxu0
    %v397 = vadd.f32 %v312, %v396
    %v398 = vpop.f32.mrb[0].mxu0
    %v399 = vpop.f32.mrb[0].mxu0
    %v400 = vpop.f32.mrb[0].mxu0
    %401 = vdwg.mxu0
    %402 = vst [vmem:[#allocation11] sm:$0xff] %v397
    // Predicated region
    $region58: #{tpu_custom_call.1} parent=1 // pred_check
      _
    $region59: #{tpu_custom_call.1} parent=1 // pred_check_branch
      %404 = sbr.rel (0) target = $region61
    $region60: #{tpu_custom_call.1} parent=1 // pred_region
      %s406 = ssub.s32 128, 128
      %407 = vsyncadd [#allocation4], %s406
      %s409 = sshll.u32 [#allocation11], 4
      %s410 = int_to_ptr.vmem [resolvable:$true] %s409
      %412 = dma.vmem_to_hbm [thread:$0]  %s410, 128, %s9, [#allocation4]
    $region61: #{tpu_custom_call.1} parent=1 // pred_fallthru
      _
    // Predicated region
    $region62: #{tpu_custom_call.1} parent=1 // pred_check
      _
    $region63: #{tpu_custom_call.1} parent=1 // pred_check_branch
      %414 = sbr.rel (0) target = $region65
    $region64: #{tpu_custom_call.1} parent=1 // pred_region
      %415 = dma.done [#allocation4], 128
    $region65: #{tpu_custom_call.1} parent=1 // pred_fallthru
      _
    %416 = vsyncpa [#allocation3], 1
    %417 = vsyncpa [#allocation6], 1
    %418 = vsyncpa [#allocation9], 1
    %419 = vsyncpa [#allocation4], 1

</llo_original>
